<compile_context>
chip_gen: v6e
topology: v6e:2x2x1
jax: 0.10.0
libtpu: 0.0.40
codegen_flags: <defaults>
</compile_context>

<pallas_src>
import functools
import math

import jax
import jax.numpy as jnp
from jax import lax
from jax.experimental import pallas as pl
from jax.experimental.pallas import tpu as pltpu

_LANE = 128
_SUBLANE = 8


def _round_up(x, m):
    return ((x + m - 1) // m) * m


def _vmem_capacity_bytes():
    """Per-TensorCore VMEM capacity; conservative fallback if query fails."""
    try:
        info = pltpu.get_tpu_info()
        cap = getattr(info, "vmem_capacity_bytes", None)
        if cap:
            return int(cap)
    except Exception:
        pass
    return 64 * 1024 * 1024  # v7x per-TC VMEM (smallest of the targets)


def _gcn_row_kernel(*refs, post_weight, add_bias, mxu_dtype, n_cols, nk, mask_k):
    """Grid (m, k): acc += adj[m, k-block] @ feat[k-block]; finalize at last k.

    refs layout: (adj_ref, feat_ref, [w_ref], [b_ref], out_ref, acc_ref).
    All matmuls accumulate in f32; the epilogue (bias add, cast) is f32.
    """
    adj_ref, feat_ref = refs[0], refs[1]
    out_ref, acc_ref = refs[-2], refs[-1]
    idx = 2
    w_ref = None
    b_ref = None
    if post_weight:
        w_ref = refs[idx]
        idx += 1
    if add_bias:
        b_ref = refs[idx]
        idx += 1

    k = pl.program_id(1)
    num_k = pl.num_programs(1)

    @pl.when(k == 0)
    def _init():
        acc_ref[...] = jnp.zeros_like(acc_ref)

    a = adj_ref[...]
    f = feat_ref[...]
    if mask_k:
        # Ragged tail on the contracted axis: zero both the OOB adj columns
        # and the OOB feat rows so stale VMEM (possibly inf/nan) never reaches
        # the accumulator (0 * garbage would still be NaN-prone otherwise).
        base = k * nk
        col = base + lax.broadcasted_iota(jnp.int32, a.shape, 1)
        a = jnp.where(col < n_cols, a, jnp.zeros_like(a))
        row = base + lax.broadcasted_iota(jnp.int32, f.shape, 0)
        f = jnp.where(row < n_cols, f, jnp.zeros_like(f))
    if a.dtype != mxu_dtype:
        a = a.astype(mxu_dtype)  # in-kernel cast: no extra HBM pass
    if f.dtype != mxu_dtype:
        f = f.astype(mxu_dtype)

    acc_ref[...] += jnp.dot(a, f, preferred_element_type=jnp.float32)

    @pl.when(k == num_k - 1)
    def _finalize():
        acc = acc_ref[...]
        if post_weight:
            acc = jnp.dot(acc.astype(mxu_dtype), w_ref[...],
                          preferred_element_type=jnp.float32)
        if add_bias:
            acc = acc + b_ref[...]
        out_ref[...] = acc.astype(out_ref.dtype)


def _xw_kernel(x_ref, w_ref, o_ref):
    # support = X @ W, one row strip per grid step (single-pass in mxu_dtype).
    o_ref[...] = jnp.dot(
        x_ref[...], w_ref[...], preferred_element_type=jnp.float32
    ).astype(o_ref.dtype)


def _compute_support(x, w_c, *, out_dtype):
    """Row-tiled support = X @ W, computed exactly once."""
    n, f_in = x.shape
    f_cols = w_c.shape[1]
    tm = n if n <= 512 else 512
    grid = (pl.cdiv(n, tm),)
    return pl.pallas_call(
        _xw_kernel,
        out_shape=jax.ShapeDtypeStruct((n, f_cols), out_dtype),
        grid=grid,
        in_specs=[
            pl.BlockSpec((tm, f_in), lambda i: (i, 0)),
            pl.BlockSpec((f_in, f_cols), lambda i: (0, 0)),
        ],
        out_specs=pl.BlockSpec((tm, f_cols), lambda i: (i, 0)),
        compiler_params=pltpu.CompilerParams(
            dimension_semantics=("parallel",)),
    )(x, w_c)


def _pick_tiles(n, f_feat, f_pad, f_in, adj_itemsize, mxu_itemsize,
                post_weight, has_bias, budget, tm_req, nk_req):
    """Largest (tm, nk) whose (double-buffered) VMEM footprint fits `budget`."""

    def usage(tm, nk):
        u = 2 * tm * nk * adj_itemsize            # streamed adj strips
        u += 2 * nk * f_feat * mxu_itemsize       # X / support blocks
        if post_weight:
            u += 2 * f_in * f_pad * mxu_itemsize  # resident weight
        if has_bias:
            u += 2 * f_pad * 4                    # bias
        u += 2 * tm * f_pad * 4                   # output tiles
        u += tm * f_feat * 4                      # f32 accumulator scratch
        return u

    def clamp_tm(t):
        return n if t >= n else max(_SUBLANE, (t // _SUBLANE) * _SUBLANE)

    def clamp_nk(c):
        return n if c >= n else max(_LANE, (c // _LANE) * _LANE)

    if tm_req is not None:
        tm_opts = [min(tm_req, n)]
    else:
        tm_opts = [t for t in (512, 256, 128, 64, 32, 16, 8) if t <= n] or [n]
    if nk_req is not None:
        nk_opts = [min(nk_req, n)]
    else:
        nk_opts = [n] + [c for c in (8192, 4096, 2048, 1024, 512, 256, 128)
                         if c < n]

    for t in tm_opts:
        tm = clamp_tm(t)
        for c in nk_opts:
            nk = clamp_nk(c)
            if usage(tm, nk) <= budget:
                return tm, nk
    # Nothing fits the budget: take the smallest candidates anyway.
    return clamp_tm(tm_opts[-1]), clamp_nk(nk_opts[-1])


def gcn_forward(x, adj, weight, bias=None, *, mxu_dtype=None, tm=None, nk=None,
                out_dtype=jnp.float32, vmem_fraction=0.85):
    """GraphConvolution forward: adj @ (x @ weight) [+ bias]."""
    x = jnp.asarray(x)
    adj = jnp.asarray(adj)
    weight = jnp.asarray(weight)
    n, f_in = x.shape
    f_in_w, f_out = weight.shape
    assert f_in_w == f_in and adj.shape == (n, n)
    has_bias = bias is not None

    # MXU input dtype.  Default: adjacency's stored dtype (exact f32 parity
    # when adj is f32; single-pass bf16 when adj already lives in bf16).
    # Passing mxu_dtype=jnp.bfloat16 with an f32 adj casts *inside* the kernel.
    if mxu_dtype is None:
        mxu_dtype = jnp.bfloat16 if adj.dtype == jnp.bfloat16 else jnp.float32
    mxu_dtype = jnp.dtype(mxu_dtype)
    out_dtype = jnp.dtype(out_dtype)

    # Lane-dense output: pad F_out to a multiple of 128 only when needed.
    f_pad = _round_up(f_out, _LANE)
    needs_pad = f_pad != f_out
    w_c = weight.astype(mxu_dtype)
    if needs_pad:
        w_c = jnp.zeros((f_in, f_pad), mxu_dtype).at[:, :f_out].set(w_c)
    if has_bias:
        b_c = jnp.asarray(bias, jnp.float32).reshape(1, f_out)
        if needs_pad:
            b_c = jnp.zeros((1, f_pad), jnp.float32).at[:, :f_out].set(b_c)

    # Associativity choice, MXU-width aware: pick the narrower streamed dot,
    # comparing widths rounded up to the 128-lane MXU granule first.
    post_weight = (_round_up(f_in, _LANE), f_in) < (f_pad, f_out)
    if post_weight:
        feat = x if x.dtype == mxu_dtype else x.astype(mxu_dtype)
    else:
        feat = _compute_support(x.astype(mxu_dtype), w_c, out_dtype=mxu_dtype)
    f_feat = feat.shape[1]

    # Generation-aware tile sizing from the real VMEM capacity.
    capacity = _vmem_capacity_bytes()
    budget = int(capacity * vmem_fraction)
    tm_eff, nk_eff = _pick_tiles(
        n, f_feat, f_pad, f_in, adj.dtype.itemsize, mxu_dtype.itemsize,
        post_weight, has_bias, budget, tm, nk)

    num_m = pl.cdiv(n, tm_eff)
    num_k = pl.cdiv(n, nk_eff)
    mask_k = (n % nk_eff) != 0

    in_specs = [
        pl.BlockSpec((tm_eff, nk_eff), lambda i, k: (i, k)),   # streamed adj
        pl.BlockSpec((nk_eff, f_feat), lambda i, k: (k, 0)),   # X / support
    ]
    args = [adj, feat]
    if post_weight:
        in_specs.append(pl.BlockSpec((f_in, f_pad), lambda i, k: (0, 0)))
        args.append(w_c)
    if has_bias:
        in_specs.append(pl.BlockSpec((1, f_pad), lambda i, k: (0, 0)))
        args.append(b_c)

    kernel = functools.partial(
        _gcn_row_kernel, post_weight=post_weight, add_bias=has_bias,
        mxu_dtype=mxu_dtype, n_cols=n, nk=nk_eff, mask_k=mask_k)

    # Advisory cost estimate so XLA overlaps surrounding ops with the call.
    flops = 2 * n * n * f_feat + (2 * n * f_in * f_pad if post_weight else 0)
    feat_passes = 1 if num_k == 1 else num_m
    bytes_accessed = (n * n * adj.dtype.itemsize
                      + feat_passes * n * f_feat * mxu_dtype.itemsize
                      + n * f_pad * out_dtype.itemsize
                      + f_in * f_pad * mxu_dtype.itemsize
                      + (f_pad * 4 if has_bias else 0))

    vmem_limit = int(min(max(budget, 32 * 1024 * 1024), capacity))

    out_p = pl.pallas_call(
        kernel,
        out_shape=jax.ShapeDtypeStruct((n, f_pad), out_dtype),
        grid=(num_m, num_k),
        in_specs=in_specs,
        out_specs=pl.BlockSpec((tm_eff, f_pad), lambda i, k: (i, 0)),
        scratch_shapes=[pltpu.VMEM((tm_eff, f_feat), jnp.float32)],
        compiler_params=pltpu.CompilerParams(
            dimension_semantics=("parallel", "arbitrary"),
            vmem_limit_bytes=vmem_limit,
        ),
        cost_estimate=pl.CostEstimate(
            flops=int(flops), transcendentals=0,
            bytes_accessed=int(bytes_accessed)),
    )(*args)

    return out_p[:, :f_out] if needs_pad else out_p


def init_gcn_params(key, in_features, out_features, with_bias=True):
    """Mirror of GraphConvolution.reset_parameters (uniform(-stdv, stdv))."""
    stdv = 1.0 / math.sqrt(out_features)
    k_w, k_b = jax.random.split(key)
    weight = jax.random.uniform(
        k_w, (in_features, out_features), dtype=jnp.float32,
        minval=-stdv, maxval=stdv)
    bias = None
    if with_bias:
        bias = jax.random.uniform(
            k_b, (out_features,), dtype=jnp.float32,
            minval=-stdv, maxval=stdv)
    return weight, bias


if __name__ == "__main__":
    key = jax.random.PRNGKey(0)
    k_x, k_adj, k_p1, k_p2 = jax.random.split(key, 4)

    # ---- Case 1/2: F_in < F_out -> (adj @ X) @ W path, padded (64 -> 128) out.
    N = 256
    F_IN, F_OUT = 32, 64

    a = (jax.random.uniform(k_adj, (N, N)) < 0.1).astype(jnp.float32)
    a = jnp.maximum(a, a.T) + jnp.eye(N, dtype=jnp.float32)
    adj = a / jnp.sum(a, axis=1, keepdims=True)

    x1 = jax.random.normal(k_x, (N, F_IN), dtype=jnp.float32)
    w1, b1 = init_gcn_params(k_p1, F_IN, F_OUT, with_bias=True)

    ref1 = jnp.dot(adj, jnp.dot(x1, w1, precision="highest"),
                   precision="highest") + b1[None, :]

    # Exact f32 (default: adj streamed in stored dtype, no casts anywhere).
    out_f32 = jax.block_until_ready(gcn_forward(x1, adj, w1, b1, tm=128))
    assert out_f32.shape == (N, F_OUT)
    assert jnp.allclose(out_f32, ref1, atol=2e-4, rtol=2e-4)

    # bf16 MXU path: adj stays f32 in HBM and is cast to bf16 inside the kernel.
    out_bf16 = jax.block_until_ready(
        gcn_forward(x1, adj, w1, b1, mxu_dtype=jnp.bfloat16))
    assert out_bf16.shape == (N, F_OUT)
    assert jnp.allclose(out_bf16, ref1, atol=5e-2, rtol=5e-2)

    # ---- Case 3: F_in > F_out -> precomputed-support path, no bias, no padding,
    # K-tiled reduction with ragged tiles (N=200, nk=128, tm=64).
    N2, F_IN2, F_OUT2 = 200, 256, 128
    a2 = (jax.random.uniform(k_adj, (N2, N2)) < 0.15).astype(jnp.float32)
    a2 = jnp.maximum(a2, a2.T) + jnp.eye(N2, dtype=jnp.float32)
    adj2 = a2 / jnp.sum(a2, axis=1, keepdims=True)

    x2 = jax.random.normal(k_x, (N2, F_IN2), dtype=jnp.float32)
    w2, _ = init_gcn_params(k_p2, F_IN2, F_OUT2, with_bias=False)
    ref2 = jnp.dot(adj2, jnp.dot(x2, w2, precision="highest"),
                   precision="highest")
    out2 = jax.block_until_ready(
        gcn_forward(x2, adj2, w2, None, tm=64, nk=128))
    assert out2.shape == (N2, F_OUT2)
    assert jnp.allclose(out2, ref2, atol=5e-4, rtol=5e-4)

    print("KERNEL_OK")
</pallas_src>

<mosaic_0001>
module attributes {stable_mosaic.version = 11 : i64} {
  func.func @_gcn_row_kernel(%arg0: i32, %arg1: i32, %arg2: memref<128x256xf32, #tpu.memory_space<vmem>>, %arg3: memref<256x32xf32, #tpu.memory_space<vmem>>, %arg4: memref<32x128xf32, #tpu.memory_space<vmem>>, %arg5: memref<1x128xf32, #tpu.memory_space<vmem>>, %arg6: memref<128x128xf32, #tpu.memory_space<vmem>>, %arg7: memref<128x32xf32, #tpu.memory_space<vmem>>) attributes {dimension_semantics = [#tpu.dimension_semantics<parallel>, #tpu.dimension_semantics<arbitrary>], iteration_bounds = array<i64: 2, 1>, scalar_prefetch = 0 : i64, scratch_operands = 1 : i64, tpu.core_type = #tpu.core_type<tc>, window_params = [{transform_indices = @transform_0, window_bounds = array<i64: 128, 256>}, {transform_indices = @transform_1, window_bounds = array<i64: 256, 32>}, {pipeline_mode = #tpu.pipeline_mode<synchronous>, transform_indices = @transform_2, window_bounds = array<i64: 32, 128>}, {pipeline_mode = #tpu.pipeline_mode<synchronous>, transform_indices = @transform_3, window_bounds = array<i64: 1, 128>}, {transform_indices = @transform_4, window_bounds = array<i64: 128, 128>}]} {
    %c0_i32 = arith.constant 0 : i32
    %0 = arith.cmpi eq, %arg1, %c0_i32 : i32
    %1 = arith.extui %0 : i1 to i32
    %c0_i32_0 = arith.constant 0 : i32
    %2 = arith.cmpi ne, %1, %c0_i32_0 : i32
    scf.if %2 {
      %cst_10 = arith.constant 0.000000e+00 : f32
      %12 = vector.broadcast %cst_10 : f32 to vector<128x32xf32>
      %c0_11 = arith.constant 0 : index
      %c0_12 = arith.constant 0 : index
      %13 = vector.load %arg7[%c0_11, %c0_12] : memref<128x32xf32, #tpu.memory_space<vmem>>, vector<128x32xf32>
      tpu.vector_store %arg7[%c0_11, %c0_12], %12 {strides = array<i32>} : memref<128x32xf32, #tpu.memory_space<vmem>>, vector<128x32xf32>,
    } else {
    }
    %c0 = arith.constant 0 : index
    %c0_1 = arith.constant 0 : index
    %3 = vector.load %arg2[%c0, %c0_1] : memref<128x256xf32, #tpu.memory_space<vmem>>, vector<128x256xf32>
    %c0_2 = arith.constant 0 : index
    %c0_3 = arith.constant 0 : index
    %4 = vector.load %arg3[%c0_2, %c0_3] : memref<256x32xf32, #tpu.memory_space<vmem>>, vector<256x32xf32>
    %c0_4 = arith.constant 0 : index
    %c0_5 = arith.constant 0 : index
    %5 = vector.load %arg7[%c0_4, %c0_5] : memref<128x32xf32, #tpu.memory_space<vmem>>, vector<128x32xf32>
    %cst = arith.constant dense<0.000000e+00> : vector<128x32xf32>
    %6 = tpu.matmul %3, %4, %cst {dimension_numbers = #tpu.dot_dimension_numbers<[1], [0], [0], [1], [0, 0, 1, 1], [], []>} : vector<128x256xf32>, vector<256x32xf32>, vector<128x32xf32> -> vector<128x32xf32>
    %7 = arith.addf %5, %6 : vector<128x32xf32>
    %c0_6 = arith.constant 0 : index
    %c0_7 = arith.constant 0 : index
    %8 = vector.load %arg7[%c0_6, %c0_7] : memref<128x32xf32, #tpu.memory_space<vmem>>, vector<128x32xf32>
    tpu.vector_store %arg7[%c0_6, %c0_7], %7 {strides = array<i32>} : memref<128x32xf32, #tpu.memory_space<vmem>>, vector<128x32xf32>,
    %c0_i32_8 = arith.constant 0 : i32
    %9 = arith.cmpi eq, %arg1, %c0_i32_8 : i32
    %10 = arith.extui %9 : i1 to i32
    %c0_i32_9 = arith.constant 0 : i32
    %11 = arith.cmpi ne, %10, %c0_i32_9 : i32
    scf.if %11 {
      %c0_10 = arith.constant 0 : index
      %c0_11 = arith.constant 0 : index
      %12 = vector.load %arg7[%c0_10, %c0_11] : memref<128x32xf32, #tpu.memory_space<vmem>>, vector<128x32xf32>
      %c0_12 = arith.constant 0 : index
      %c0_13 = arith.constant 0 : index
      %13 = vector.load %arg4[%c0_12, %c0_13] : memref<32x128xf32, #tpu.memory_space<vmem>>, vector<32x128xf32>
      %cst_14 = arith.constant dense<0.000000e+00> : vector<128x128xf32>
      %14 = tpu.matmul %12, %13, %cst_14 {dimension_numbers = #tpu.dot_dimension_numbers<[1], [0], [0], [1], [0, 0, 1, 1], [], []>} : vector<128x32xf32>, vector<32x128xf32>, vector<128x128xf32> -> vector<128x128xf32>
      %c0_15 = arith.constant 0 : index
      %c0_16 = arith.constant 0 : index
      %15 = vector.load %arg5[%c0_15, %c0_16] : memref<1x128xf32, #tpu.memory_space<vmem>>, vector<1x128xf32>
      %16 = vector.broadcast %15 : vector<1x128xf32> to vector<128x128xf32>
      %17 = arith.addf %14, %16 : vector<128x128xf32>
      %c0_17 = arith.constant 0 : index
      %c0_18 = arith.constant 0 : index
      %18 = vector.load %arg6[%c0_17, %c0_18] : memref<128x128xf32, #tpu.memory_space<vmem>>, vector<128x128xf32>
      tpu.vector_store %arg6[%c0_17, %c0_18], %17 {strides = array<i32>} : memref<128x128xf32, #tpu.memory_space<vmem>>, vector<128x128xf32>,
    } else {
    }
    return
  }
  func.func @transform_0(%arg0: i32, %arg1: i32) -> (i32, i32) {
    %c0_i32 = arith.constant 0 : i32
    return %arg0, %arg1 : i32, i32
  }
  func.func @transform_1(%arg0: i32, %arg1: i32) -> (i32, i32) {
    %c0_i32 = arith.constant 0 : i32
    %c0_i32_0 = arith.constant 0 : i32
    return %arg1, %c0_i32 : i32, i32
  }
  func.func @transform_2(%arg0: i32, %arg1: i32) -> (i32, i32) {
    %c0_i32 = arith.constant 0 : i32
    %c0_i32_0 = arith.constant 0 : i32
    %c0_i32_1 = arith.constant 0 : i32
    return %c0_i32, %c0_i32_0 : i32, i32
  }
  func.func @transform_3(%arg0: i32, %arg1: i32) -> (i32, i32) {
    %c0_i32 = arith.constant 0 : i32
    %c0_i32_0 = arith.constant 0 : i32
    %c0_i32_1 = arith.constant 0 : i32
    return %c0_i32, %c0_i32_0 : i32, i32
  }
  func.func @transform_4(%arg0: i32, %arg1: i32) -> (i32, i32) {
    %c0_i32 = arith.constant 0 : i32
    %c0_i32_0 = arith.constant 0 : i32
    return %arg0, %c0_i32 : i32, i32
  }
}

</mosaic_0001>

<llo_original>
// kernel: tpu_custom_call.1
$region0: #{tpu_custom_call.1}
  #allocation0 [shape = 'u32[]', space=smem, size = 0x4, offset = 0x4, fixed_abs, tag = 'smem constant byte address 0x4 - core index']
  #allocation1 [shape = 'u32[144,128]{1,0:T(1,128)}', space=vmem, size = 0x12000, scoped, tag = 'internal scratch']
  #allocation2 [shape = 'f32[128,32]{1,0:T(8,128)}', space=vmem, size = 0x10000, scoped, tag = 'scratch operand']
  %s0 = inlined_call_operand.hbm [shape: f32[256,256], index: 0, kind: input, shape index: {}]
  %s1 = inlined_call_operand.vmem [shape: f32[256,32], index: 1, kind: input, shape index: {}]
  %s2 = inlined_call_operand.vmem [shape: f32[32,128], index: 2, kind: input, shape index: {}]
  %s3 = inlined_call_operand.vmem [shape: f32[1,128], index: 3, kind: input, shape index: {}]
  %s4 = inlined_call_operand.hbm [shape: f32[256,128], index: 4, kind: output, shape index: {}]
  %s5 = sld [smem:[#allocation0]]
  $region61: #{tpu_custom_call.1} parent=0
    _
  %s7 = ssub.s32 1, %s5
  %s8 = scalar_select 0, %s7, %s5
  $region1: #{tpu_custom_call.1} parent=0
    #allocation3 [shape = 'u8[262144]{0}', space=vmem, size = 0x40000, scoped, tag = 'input window, operand 0']
    #allocation4 [shape = 's32[2]{0}', space=sflag, size = 0x8, scoped, tag = 'scoped memory for tpu_custom_call.1']
    #allocation5 [shape = 's32[2]{0}', space=sflag, size = 0x8, scoped, tag = 'scoped memory for tpu_custom_call.1']
    #allocation6 [shape = 'u8[131072]{0}', space=vmem, size = 0x20000, scoped, tag = 'output window, operand 0']
    %9 = vsyncpa [#allocation4], 0
    %s10 = scalar_lea.sflag [#allocation4], 1
    %11 = vsyncpa %s10, 0
    %12 = vsyncpa [#allocation5], 0
    %s13 = scalar_lea.sflag [#allocation5], 1
    %14 = vsyncpa %s13, 0
    loop: start=0, step=1, limit=4
    $region2: #{tpu_custom_call.1} parent=1 // loop_pre_header
      _
    $region3: #{tpu_custom_call.1} parent=1 // loop_header
      %s16 = sphi 0, %s20
      %p17 = scmp.ge.s32.totalorder %s16, 4
      %s23 = sphi 0, %s35
      %s24 = sphi 0, %s31
      %s25 = sphi 0, %s23
      %s26 = sphi 0, %s24
      %s27 = sphi 0, %s25
      %s28 = sphi 0, %s26
      %s40 = sphi 0, %s42
      %s43 = sphi 0, %s40
      %s44 = sphi 0, %s43
      %s60 = sphi 0, %s44
      %s66 = sphi 0, %s68
      %s69 = sphi 0, %s66
      %s70 = sphi 0, %s69
      %s86 = sphi 0, %s70
      %s90 = sphi 0, %s90
      %s92 = sphi 0, %s90
      %s93 = sphi 0, %s92
      %s107 = sphi 0, %s93
      %s111 = sphi 0, %s111
      %s113 = sphi 0, %s111
      %s114 = sphi 0, %s113
      %s128 = sphi 0, %s114
      %s134 = sphi 0, %s136
      %s137 = sphi 0, %s134
      %s138 = sphi 0, %s137
      %s154 = sphi 0, %s138
    $region4: #{tpu_custom_call.1} parent=1 // loop_header_branch
      %19 = sbr.rel (%p17) target = $region8
    $region5: #{tpu_custom_call.1} parent=1 // loop_body
      %s21 = ssub.s32 %s16, 1
      %s22 = ssub.s32 %s16, 2
      %s29 = sadd.s32 1, %s24
      %p30 = scmp.ge.s32.totalorder %s29, 1
      %s31 = scalar_select %p30, 0, %s29
      %s32 = sadd.s32 1, %s23
      %s33 = scalar_select %p30, %s32, %s23
      %p34 = scmp.ge.s32.totalorder %s33, 2
      %s35 = scalar_select %p34, 0, %s33
      %s36 = ssub.s32 %s23, %s35
      %s37 = ssub.s32 %s24, %s31
      %s38 = sor.u32 %s36, %s37
      %p39 = scmp.eq.s32.totalorder %s38, 0
      %s41 = sadd.s32 %s40, 1
      %s42 = scalar_select %p39, %s40, %s41
      %p45 = pneg %p39
      %p46 = scmp.eq.s32.totalorder %s16, 1
      %p47 = por %p45, %p46
      %p48 = scmp.ne.s32.totalorder %s40, %s43
      %p49 = scmp.eq.s32.totalorder %s16, 0
      %p50 = por %p48, %p49
      %p51 = scmp.ne.s32.totalorder %s40, %s43
      %p52 = scmp.eq.s32.totalorder %s21, 1
      %p53 = por %p51, %p52
      %p54 = scmp.ne.s32.totalorder %s43, %s44
      %p55 = scmp.eq.s32.totalorder %s21, 0
      %p56 = por %p54, %p55
      %p57 = scmp.ne.s32.totalorder %s43, %s44
      %p58 = scmp.eq.s32.totalorder %s22, 1
      %p59 = por %p57, %p58
      %p61 = scmp.ne.s32.totalorder %s44, %s60
      %p62 = scmp.eq.s32.totalorder %s22, 0
      %p63 = por %p61, %p62
      %s64 = ssub.s32 %s24, %s31
      %p65 = scmp.eq.s32.totalorder %s64, 0
      %s67 = sadd.s32 %s66, 1
      %s68 = scalar_select %p65, %s66, %s67
      %p71 = pneg %p65
      %p72 = scmp.eq.s32.totalorder %s16, 1
      %p73 = por %p71, %p72
      %p74 = scmp.ne.s32.totalorder %s66, %s69
      %p75 = scmp.eq.s32.totalorder %s16, 0
      %p76 = por %p74, %p75
      %p77 = scmp.ne.s32.totalorder %s66, %s69
      %p78 = scmp.eq.s32.totalorder %s21, 1
      %p79 = por %p77, %p78
      %p80 = scmp.ne.s32.totalorder %s69, %s70
      %p81 = scmp.eq.s32.totalorder %s21, 0
      %p82 = por %p80, %p81
      %p83 = scmp.ne.s32.totalorder %s69, %s70
      %p84 = scmp.eq.s32.totalorder %s22, 1
      %p85 = por %p83, %p84
      %p87 = scmp.ne.s32.totalorder %s70, %s86
      %p88 = scmp.eq.s32.totalorder %s22, 0
      %p89 = por %p87, %p88
      %s91 = sadd.s32 %s90, 1
      %p94 = scmp.eq.s32.totalorder %s16, 1
      %p95 = scmp.ne.s32.totalorder %s90, %s92
      %p96 = scmp.eq.s32.totalorder %s16, 0
      %p97 = por %p95, %p96
      %p98 = scmp.ne.s32.totalorder %s90, %s92
      %p99 = scmp.eq.s32.totalorder %s21, 1
      %p100 = por %p98, %p99
      %p101 = scmp.ne.s32.totalorder %s92, %s93
      %p102 = scmp.eq.s32.totalorder %s21, 0
      %p103 = por %p101, %p102
      %p104 = scmp.ne.s32.totalorder %s92, %s93
      %p105 = scmp.eq.s32.totalorder %s22, 1
      %p106 = por %p104, %p105
      %p108 = scmp.ne.s32.totalorder %s93, %s107
      %p109 = scmp.eq.s32.totalorder %s22, 0
      %p110 = por %p108, %p109
      %s112 = sadd.s32 %s111, 1
      %p115 = scmp.eq.s32.totalorder %s16, 1
      %p116 = scmp.ne.s32.totalorder %s111, %s113
      %p117 = scmp.eq.s32.totalorder %s16, 0
      %p118 = por %p116, %p117
      %p119 = scmp.ne.s32.totalorder %s111, %s113
      %p120 = scmp.eq.s32.totalorder %s21, 1
      %p121 = por %p119, %p120
      %p122 = scmp.ne.s32.totalorder %s113, %s114
      %p123 = scmp.eq.s32.totalorder %s21, 0
      %p124 = por %p122, %p123
      %p125 = scmp.ne.s32.totalorder %s113, %s114
      %p126 = scmp.eq.s32.totalorder %s22, 1
      %p127 = por %p125, %p126
      %p129 = scmp.ne.s32.totalorder %s114, %s128
      %p130 = scmp.eq.s32.totalorder %s22, 0
      %p131 = por %p129, %p130
      %s132 = ssub.s32 %s23, %s35
      %p133 = scmp.eq.s32.totalorder %s132, 0
      %s135 = sadd.s32 %s134, 1
      %s136 = scalar_select %p133, %s134, %s135
      %p139 = pneg %p133
      %p140 = scmp.eq.s32.totalorder %s16, 1
      %p141 = por %p139, %p140
      %p142 = scmp.ne.s32.totalorder %s134, %s137
      %p143 = scmp.eq.s32.totalorder %s16, 0
      %p144 = por %p142, %p143
      %p145 = scmp.ne.s32.totalorder %s134, %s137
      %p146 = scmp.eq.s32.totalorder %s21, 1
      %p147 = por %p145, %p146
      %p148 = scmp.ne.s32.totalorder %s137, %s138
      %p149 = scmp.eq.s32.totalorder %s21, 0
      %p150 = por %p148, %p149
      %p151 = scmp.ne.s32.totalorder %s137, %s138
      %p152 = scmp.eq.s32.totalorder %s22, 1
      %p153 = por %p151, %p152
      %p155 = scmp.ne.s32.totalorder %s138, %s154
      %p156 = scmp.eq.s32.totalorder %s22, 0
      %p157 = por %p155, %p156
      %p158 = scmp.le.s32.totalorder 1, %s16
      %p159 = scmp.lt.s32.totalorder %s16, 3
      %p160 = pnand %p158, %p159
      %p161 = pneg %p160
      // Predicated region
      $region9: #{tpu_custom_call.1} parent=5 // pred_check
        _
      $region10: #{tpu_custom_call.1} parent=5 // pred_check_branch
        %163 = sbr.rel (%p160) target = $region12
      $region11: #{tpu_custom_call.1} parent=5 // pred_region
        %s164 = ssub.s32 %s16, 1
        // Predicated region
        $region13: #{tpu_custom_call.1} parent=11 // pred_check
          %p165 = pneg %p82
        $region14: #{tpu_custom_call.1} parent=11 // pred_check_branch
          %167 = sbr.rel (%p165) target = $region16
        $region15: #{tpu_custom_call.1} parent=11 // pred_region
          %s168 = smul.u32 32, %s26
          %p169 = scmp.lt.s32.totalorder %s168, 31
          %s170 = scalar_select %p169, %s168, 31
          %s171 = smul.addr %s170, 8
          %s172 = scalar_lea.vmem %s1, %s171
          %s173 = smul.u32 32, %s26
        $region16: #{tpu_custom_call.1} parent=11 // pred_fallthru
          _
        // Predicated region
        $region17: #{tpu_custom_call.1} parent=11 // pred_check
          %p174 = pneg %p103
        $region18: #{tpu_custom_call.1} parent=11 // pred_check_branch
          %176 = sbr.rel (%p174) target = $region20
        $region19: #{tpu_custom_call.1} parent=11 // pred_region
          _
        $region20: #{tpu_custom_call.1} parent=11 // pred_fallthru
          _
        // Predicated region
        $region21: #{tpu_custom_call.1} parent=11 // pred_check
          %p177 = pneg %p124
        $region22: #{tpu_custom_call.1} parent=11 // pred_check_branch
          %179 = sbr.rel (%p177) target = $region24
        $region23: #{tpu_custom_call.1} parent=11 // pred_region
          _
        $region24: #{tpu_custom_call.1} parent=11 // pred_fallthru
          _
      $region12: #{tpu_custom_call.1} parent=5 // pred_fallthru
        _
      %p180 = scmp.lt.s32.totalorder %s16, 2
      // Predicated region
      $region25: #{tpu_custom_call.1} parent=5 // pred_check
        %p181 = pneg %p180
      $region26: #{tpu_custom_call.1} parent=5 // pred_check_branch
        %183 = sbr.rel (%p181) target = $region28
      $region27: #{tpu_custom_call.1} parent=5 // pred_region
        // Predicated region
        $region29: #{tpu_custom_call.1} parent=27 // pred_check
          %p184 = pneg %p50
        $region30: #{tpu_custom_call.1} parent=27 // pred_check_branch
          %186 = sbr.rel (%p184) target = $region32
        $region31: #{tpu_custom_call.1} parent=27 // pred_region
          %s187 = sand.u32 %s40, 1
          %s188 = scalar_lea.sflag [#allocation4], %s187
          %s189 = sand.u32 %s40, 1
          %s190 = smul.addr %s189, 256
          %s191 = scalar_lea.vmem [#allocation3], %s190
          %s192 = smul.u32 16, %s23
          %s193 = smul.u32 2, %s24
          %s195 = ssub.s32 4096, 4096
          %196 = vsyncadd %s188, %s195
          %s197 = smul.addr %s192, 2
          %s198 = sadd.s32 %s193, %s197
          %s199 = smul.addr %s198, 128
          %s200 = scalar_lea.hbm %s0, %s199
          %s201 = sshll.u32 %s191, 4
          %s202 = int_to_ptr.vmem [resolvable:$true] %s201
          %207 = dma.hbm_to_vmem [thread:$0]  %s200, 4096, %s202, %s188, 256, 256, 16
        $region32: #{tpu_custom_call.1} parent=27 // pred_fallthru
          _
      $region28: #{tpu_custom_call.1} parent=5 // pred_fallthru
        _
      %p208 = scmp.le.s32.totalorder 1, %s16
      %p209 = scmp.lt.s32.totalorder %s16, 3
      %p210 = pnand %p208, %p209
      %p211 = pneg %p210
      // Predicated region
      $region33: #{tpu_custom_call.1} parent=5 // pred_check
        _
      $region34: #{tpu_custom_call.1} parent=5 // pred_check_branch
        %213 = sbr.rel (%p210) target = $region36
      $region35: #{tpu_custom_call.1} parent=5 // pred_region
        %s214 = ssub.s32 %s16, 1
        %s215 = sand.u32 %s43, 1
        %s216 = scalar_lea.sflag [#allocation4], %s215
        %s217 = sand.u32 %s43, 1
        %s218 = smul.addr %s217, 256
        %s219 = scalar_lea.vmem [#allocation3], %s218
        // Predicated region
        $region37: #{tpu_custom_call.1} parent=35 // pred_check
          %p220 = pneg %p56
        $region38: #{tpu_custom_call.1} parent=35 // pred_check_branch
          %222 = sbr.rel (%p220) target = $region40
        $region39: #{tpu_custom_call.1} parent=35 // pred_region
          %223 = dma.done %s216, 4096
        $region40: #{tpu_custom_call.1} parent=35 // pred_fallthru
          _
        %s224 = sand.u32 %s43, 1
        %s225 = scalar_lea.sflag [#allocation4], %s224
        %s226 = sand.u32 %s43, 1
        %s227 = smul.addr %s226, 256
        %s228 = scalar_lea.vmem [#allocation3], %s227
        %p229 = pneg %p56
        %p230 = pneg %p53
        %s231 = smul.u32 32, %s26
        %p232 = scmp.lt.s32.totalorder %s231, 31
        %s233 = scalar_select %p232, %s231, 31
        %s234 = smul.addr %s233, 8
        %s235 = scalar_lea.vmem %s1, %s234
        %p236 = pneg %p82
        %p237 = pneg %p79
        %p238 = pneg %p103
        %p239 = pneg %p100
        %p240 = pneg %p124
        %p241 = pneg %p121
        %p242 = pneg %p150
        %p243 = pneg %p147
        %s244 = sand.u32 %s137, 1
        %s245 = scalar_lea.sflag [#allocation5], %s244
        %s246 = sand.u32 %s137, 1
        %s247 = smul.addr %s246, 128
        %s248 = scalar_lea.vmem [#allocation6], %s247
        %s249 = smul.u32 16, %s25
        %s250 = smul.u32 2, %s26
        %s251 = smul.u32 32, %s26
        %p252 = scmp.lt.s32.totalorder %s251, 31
        %s253 = scalar_select %p252, %s251, 31
        %s254 = smul.addr %s253, 8
        %s255 = scalar_lea.vmem %s1, %s254
        %s256 = smul.u32 32, %s26
        %s257 = smul.u32 16, %s25
        %p258 = scmp.eq.s32.totalorder %s26, 0
        // Predicated region
        $region41: #{tpu_custom_call.1} parent=35 // pred_check
          %p259 = pneg %p258
        $region42: #{tpu_custom_call.1} parent=35 // pred_check_branch
          %261 = sbr.rel (%p259) target = $region44
        $region43: #{tpu_custom_call.1} parent=35 // pred_region
          %vm262 = vcmask 261120
          %263 = vst.msk [vmem:[#allocation2] sm:$0xff] %vm262, 0.0
          %264 = vst.msk [vmem:[#allocation2 + $0x8] sm:$0xff] %vm262, 0.0
          %265 = vst.msk [vmem:[#allocation2 + $0x10] sm:$0xff] %vm262, 0.0
          %266 = vst.msk [vmem:[#allocation2 + $0x18] sm:$0xff] %vm262, 0.0
          %267 = vst.msk [vmem:[#allocation2 + $0x20] sm:$0xff] %vm262, 0.0
          %268 = vst.msk [vmem:[#allocation2 + $0x28] sm:$0xff] %vm262, 0.0
          %269 = vst.msk [vmem:[#allocation2 + $0x30] sm:$0xff] %vm262, 0.0
          %270 = vst.msk [vmem:[#allocation2 + $0x38] sm:$0xff] %vm262, 0.0
          %271 = vst.msk [vmem:[#allocation2 + $0x40] sm:$0xff] %vm262, 0.0
          %272 = vst.msk [vmem:[#allocation2 + $0x48] sm:$0xff] %vm262, 0.0
          %273 = vst.msk [vmem:[#allocation2 + $0x50] sm:$0xff] %vm262, 0.0
          %274 = vst.msk [vmem:[#allocation2 + $0x58] sm:$0xff] %vm262, 0.0
          %275 = vst.msk [vmem:[#allocation2 + $0x60] sm:$0xff] %vm262, 0.0
          %276 = vst.msk [vmem:[#allocation2 + $0x68] sm:$0xff] %vm262, 0.0
          %277 = vst.msk [vmem:[#allocation2 + $0x70] sm:$0xff] %vm262, 0.0
          %278 = vst.msk [vmem:[#allocation2 + $0x78] sm:$0xff] %vm262, 0.0
        $region44: #{tpu_custom_call.1} parent=35 // pred_fallthru
          _
        %v279 = vld [vmem:[%s219] sm:$0xff]
        %v280 = vld [vmem:[%s219 + $0x8] sm:$0xff]
        %v281 = vld [vmem:[%s219 + $0x10] sm:$0xff]
        %v282 = vld [vmem:[%s219 + $0x18] sm:$0xff]
        %v283 = vld [vmem:[%s219 + $0x20] sm:$0xff]
        %v284 = vld [vmem:[%s219 + $0x28] sm:$0xff]
        %v285 = vld [vmem:[%s219 + $0x30] sm:$0xff]
        %v286 = vld [vmem:[%s219 + $0x38] sm:$0xff]
        %v287 = vld [vmem:[%s219 + $0x40] sm:$0xff]
        %v288 = vld [vmem:[%s219 + $0x48] sm:$0xff]
        %v289 = vld [vmem:[%s219 + $0x50] sm:$0xff]
        %v290 = vld [vmem:[%s219 + $0x58] sm:$0xff]
        %v291 = vld [vmem:[%s219 + $0x60] sm:$0xff]
        %v292 = vld [vmem:[%s219 + $0x68] sm:$0xff]
        %v293 = vld [vmem:[%s219 + $0x70] sm:$0xff]
        %v294 = vld [vmem:[%s219 + $0x78] sm:$0xff]
        %v295 = vld [vmem:[%s219 + $0x80] sm:$0xff]
        %v296 = vld [vmem:[%s219 + $0x88] sm:$0xff]
        %v297 = vld [vmem:[%s219 + $0x90] sm:$0xff]
        %v298 = vld [vmem:[%s219 + $0x98] sm:$0xff]
        %v299 = vld [vmem:[%s219 + $0xa0] sm:$0xff]
        %v300 = vld [vmem:[%s219 + $0xa8] sm:$0xff]
        %v301 = vld [vmem:[%s219 + $0xb0] sm:$0xff]
        %v302 = vld [vmem:[%s219 + $0xb8] sm:$0xff]
        %v303 = vld [vmem:[%s219 + $0xc0] sm:$0xff]
        %v304 = vld [vmem:[%s219 + $0xc8] sm:$0xff]
        %v305 = vld [vmem:[%s219 + $0xd0] sm:$0xff]
        %v306 = vld [vmem:[%s219 + $0xd8] sm:$0xff]
        %v307 = vld [vmem:[%s219 + $0xe0] sm:$0xff]
        %v308 = vld [vmem:[%s219 + $0xe8] sm:$0xff]
        %v309 = vld [vmem:[%s219 + $0xf0] sm:$0xff]
        %v310 = vld [vmem:[%s219 + $0xf8] sm:$0xff]
        %v311 = vld [vmem:[%s255] sm:$0xff]
        %v312 = vld [vmem:[%s255 + $0x8] sm:$0xff]
        %v313 = vld [vmem:[%s255 + $0x10] sm:$0xff]
        %v314 = vld [vmem:[%s255 + $0x18] sm:$0xff]
        %v315 = vld [vmem:[%s255 + $0x20] sm:$0xff]
        %v316 = vld [vmem:[%s255 + $0x28] sm:$0xff]
        %v317 = vld [vmem:[%s255 + $0x30] sm:$0xff]
        %v318 = vld [vmem:[%s255 + $0x38] sm:$0xff]
        %v319 = vld [vmem:[%s255 + $0x40] sm:$0xff]
        %v320 = vld [vmem:[%s255 + $0x48] sm:$0xff]
        %v321 = vld [vmem:[%s255 + $0x50] sm:$0xff]
        %v322 = vld [vmem:[%s255 + $0x58] sm:$0xff]
        %v323 = vld [vmem:[%s255 + $0x60] sm:$0xff]
        %v324 = vld [vmem:[%s255 + $0x68] sm:$0xff]
        %v325 = vld [vmem:[%s255 + $0x70] sm:$0xff]
        %v326 = vld [vmem:[%s255 + $0x78] sm:$0xff]
        %v327 = vld [vmem:[%s255 + $0x80] sm:$0xff]
        %v328 = vld [vmem:[%s255 + $0x88] sm:$0xff]
        %v329 = vld [vmem:[%s255 + $0x90] sm:$0xff]
        %v330 = vld [vmem:[%s255 + $0x98] sm:$0xff]
        %v331 = vld [vmem:[%s255 + $0xa0] sm:$0xff]
        %v332 = vld [vmem:[%s255 + $0xa8] sm:$0xff]
        %v333 = vld [vmem:[%s255 + $0xb0] sm:$0xff]
        %v334 = vld [vmem:[%s255 + $0xb8] sm:$0xff]
        %v335 = vld [vmem:[%s255 + $0xc0] sm:$0xff]
        %v336 = vld [vmem:[%s255 + $0xc8] sm:$0xff]
        %v337 = vld [vmem:[%s255 + $0xd0] sm:$0xff]
        %v338 = vld [vmem:[%s255 + $0xd8] sm:$0xff]
        %v339 = vld [vmem:[%s255 + $0xe0] sm:$0xff]
        %v340 = vld [vmem:[%s255 + $0xe8] sm:$0xff]
        %v341 = vld [vmem:[%s255 + $0xf0] sm:$0xff]
        %v342 = vld [vmem:[%s255 + $0xf8] sm:$0xff]
        %v343 = vld [vmem:[#allocation2] sm:$0xff]
        %v344 = vld [vmem:[#allocation2 + $0x8] sm:$0xff]
        %v345 = vld [vmem:[#allocation2 + $0x10] sm:$0xff]
        %v346 = vld [vmem:[#allocation2 + $0x18] sm:$0xff]
        %v347 = vld [vmem:[#allocation2 + $0x20] sm:$0xff]
        %v348 = vld [vmem:[#allocation2 + $0x28] sm:$0xff]
        %v349 = vld [vmem:[#allocation2 + $0x30] sm:$0xff]
        %v350 = vld [vmem:[#allocation2 + $0x38] sm:$0xff]
        %v351 = vld [vmem:[#allocation2 + $0x40] sm:$0xff]
        %v352 = vld [vmem:[#allocation2 + $0x48] sm:$0xff]
        %v353 = vld [vmem:[#allocation2 + $0x50] sm:$0xff]
        %v354 = vld [vmem:[#allocation2 + $0x58] sm:$0xff]
        %v355 = vld [vmem:[#allocation2 + $0x60] sm:$0xff]
        %v356 = vld [vmem:[#allocation2 + $0x68] sm:$0xff]
        %v357 = vld [vmem:[#allocation2 + $0x70] sm:$0xff]
        %v358 = vld [vmem:[#allocation2 + $0x78] sm:$0xff]
        %359 = vmatprep.subr.mxu0 0.0
        %360 = vmatpush1.msra.mxu0 %v326
        %361 = vmatprep.subr.mxu0 0.0
        %362 = vmatpush1.msra.mxu0 %v325
        %363 = vmatprep.subr.mxu0 0.0
        %364 = vmatpush1.msra.mxu0 %v324
        %365 = vmatprep.subr.mxu0 0.0
        %366 = vmatpush1.msra.mxu0 %v323
        %367 = vmatprep.subr.mxu0 0.0
        %368 = vmatpush1.msra.mxu0 %v322
        %369 = vmatprep.subr.mxu0 0.0
        %370 = vmatpush1.msra.mxu0 %v321
        %371 = vmatprep.subr.mxu0 0.0
        %372 = vmatpush1.msra.mxu0 %v320
        %373 = vmatprep.subr.mxu0 0.0
        %374 = vmatpush1.msra.mxu0 %v319
        %375 = vmatprep.subr.mxu0 0.0
        %376 = vmatpush1.msra.mxu0 %v318
        %377 = vmatprep.subr.mxu0 0.0
        %378 = vmatpush1.msra.mxu0 %v317
        %379 = vmatprep.subr.mxu0 0.0
        %380 = vmatpush1.msra.mxu0 %v316
        %381 = vmatprep.subr.mxu0 0.0
        %382 = vmatpush1.msra.mxu0 %v315
        %383 = vmatprep.subr.mxu0 0.0
        %384 = vmatpush1.msra.mxu0 %v314
        %385 = vmatprep.subr.mxu0 0.0
        %386 = vmatpush1.msra.mxu0 %v313
        %387 = vmatprep.subr.mxu0 0.0
        %388 = vmatpush1.msra.mxu0 %v312
        %389 = vmatprep.subr.mxu0 0.0
        %390 = vmatpush1.msra.mxu0 %v311
        %391 = vmatprep.subr.mxu0 0.0
        %392 = vmatpush2.msra.mxu0 %v342
        %393 = vmatprep.subr.mxu0 0.0
        %394 = vmatpush2.msra.mxu0 %v341
        %395 = vmatprep.subr.mxu0 0.0
        %396 = vmatpush2.msra.mxu0 %v340
        %397 = vmatprep.subr.mxu0 0.0
        %398 = vmatpush2.msra.mxu0 %v339
        %399 = vmatprep.subr.mxu0 0.0
        %400 = vmatpush2.msra.mxu0 %v338
        %401 = vmatprep.subr.mxu0 0.0
        %402 = vmatpush2.msra.mxu0 %v337
        %403 = vmatprep.subr.mxu0 0.0
        %404 = vmatpush2.msra.mxu0 %v336
        %405 = vmatprep.subr.mxu0 0.0
        %406 = vmatpush2.msra.mxu0 %v335
        %407 = vmatprep.subr.mxu0 0.0
        %408 = vmatpush2.msra.mxu0 %v334
        %409 = vmatprep.subr.mxu0 0.0
        %410 = vmatpush2.msra.mxu0 %v333
        %411 = vmatprep.subr.mxu0 0.0
        %412 = vmatpush2.msra.mxu0 %v332
        %413 = vmatprep.subr.mxu0 0.0
        %414 = vmatpush2.msra.mxu0 %v331
        %415 = vmatprep.subr.mxu0 0.0
        %416 = vmatpush2.msra.mxu0 %v330
        %417 = vmatprep.subr.mxu0 0.0
        %418 = vmatpush2.msra.mxu0 %v329
        %419 = vmatprep.subr.mxu0 0.0
        %420 = vmatpush2.msra.mxu0 %v328
        %421 = vmatprep.subr.mxu0 0.0
        %422 = vmatpush2.msra.mxu0 %v327
        %423 = vmatprep.mubr.f32.mxu0 %v280
        %424 = vmatmul.mubr.f32.gmra.mxu0 %v279
        %v425 = vpop.f32.mrf.mxu0
        %v426 = vadd.f32 0.0, %v425
        %v427 = vpop.f32.mrf.mxu0
        %428 = vmatprep.mubr.f32.mxu0 %v282
        %429 = vmatmul.mubr.f32.gmra.mxu0 %v281
        %v430 = vpop.f32.mrf.mxu0
        %v431 = vadd.f32 0.0, %v430
        %v432 = vpop.f32.mrf.mxu0
        %433 = vmatprep.mubr.f32.mxu0 %v284
        %434 = vmatmul.mubr.f32.gmra.mxu0 %v283
        %v435 = vpop.f32.mrf.mxu0
        %v436 = vadd.f32 0.0, %v435
        %v437 = vpop.f32.mrf.mxu0
        %438 = vmatprep.mubr.f32.mxu0 %v286
        %439 = vmatmul.mubr.f32.gmra.mxu0 %v285
        %v440 = vpop.f32.mrf.mxu0
        %v441 = vadd.f32 0.0, %v440
        %v442 = vpop.f32.mrf.mxu0
        %443 = vmatprep.mubr.f32.mxu0 %v288
        %444 = vmatmul.mubr.f32.gmra.mxu0 %v287
        %v445 = vpop.f32.mrf.mxu0
        %v446 = vadd.f32 0.0, %v445
        %v447 = vpop.f32.mrf.mxu0
        %448 = vmatprep.mubr.f32.mxu0 %v290
        %449 = vmatmul.mubr.f32.gmra.mxu0 %v289
        %v450 = vpop.f32.mrf.mxu0
        %v451 = vadd.f32 0.0, %v450
        %v452 = vpop.f32.mrf.mxu0
        %453 = vmatprep.mubr.f32.mxu0 %v292
        %454 = vmatmul.mubr.f32.gmra.mxu0 %v291
        %v455 = vpop.f32.mrf.mxu0
        %v456 = vadd.f32 0.0, %v455
        %v457 = vpop.f32.mrf.mxu0
        %458 = vmatprep.mubr.f32.mxu0 %v294
        %459 = vmatmul.mubr.f32.gmra.mxu0 %v293
        %v460 = vpop.f32.mrf.mxu0
        %v461 = vadd.f32 0.0, %v460
        %v462 = vpop.f32.mrf.mxu0
        %463 = vmatprep.mubr.f32.mxu0 %v296
        %464 = vmatmul.mubr.f32.gmra.mxu0 %v295
        %v465 = vpop.f32.mrf.mxu0
        %v466 = vadd.f32 0.0, %v465
        %v467 = vpop.f32.mrf.mxu0
        %468 = vmatprep.mubr.f32.mxu0 %v298
        %469 = vmatmul.mubr.f32.gmra.mxu0 %v297
        %v470 = vpop.f32.mrf.mxu0
        %v471 = vadd.f32 0.0, %v470
        %v472 = vpop.f32.mrf.mxu0
        %473 = vmatprep.mubr.f32.mxu0 %v300
        %474 = vmatmul.mubr.f32.gmra.mxu0 %v299
        %v475 = vpop.f32.mrf.mxu0
        %v476 = vadd.f32 0.0, %v475
        %v477 = vpop.f32.mrf.mxu0
        %478 = vmatprep.mubr.f32.mxu0 %v302
        %479 = vmatmul.mubr.f32.gmra.mxu0 %v301
        %v480 = vpop.f32.mrf.mxu0
        %v481 = vadd.f32 0.0, %v480
        %v482 = vpop.f32.mrf.mxu0
        %483 = vmatprep.mubr.f32.mxu0 %v304
        %484 = vmatmul.mubr.f32.gmra.mxu0 %v303
        %v485 = vpop.f32.mrf.mxu0
        %v486 = vadd.f32 0.0, %v485
        %v487 = vpop.f32.mrf.mxu0
        %488 = vmatprep.mubr.f32.mxu0 %v306
        %489 = vmatmul.mubr.f32.gmra.mxu0 %v305
        %v490 = vpop.f32.mrf.mxu0
        %v491 = vadd.f32 0.0, %v490
        %v492 = vpop.f32.mrf.mxu0
        %493 = vmatprep.mubr.f32.mxu0 %v308
        %494 = vmatmul.mubr.f32.gmra.mxu0 %v307
        %v495 = vpop.f32.mrf.mxu0
        %v496 = vadd.f32 0.0, %v495
        %v497 = vpop.f32.mrf.mxu0
        %498 = vmatprep.mubr.f32.mxu0 %v310
        %499 = vmatmul.mubr.f32.gmra.mxu0 %v309
        %v500 = vpop.f32.mrf.mxu0
        %v501 = vadd.f32 0.0, %v500
        %v502 = vpop.f32.mrf.mxu0
        %503 = vdwg.mxu0
        %v504 = vadd.f32 %v343, %v426
        %v505 = vadd.f32 %v344, %v431
        %v506 = vadd.f32 %v345, %v436
        %v507 = vadd.f32 %v346, %v441
        %v508 = vadd.f32 %v347, %v446
        %v509 = vadd.f32 %v348, %v451
        %v510 = vadd.f32 %v349, %v456
        %v511 = vadd.f32 %v350, %v461
        %v512 = vadd.f32 %v351, %v466
        %v513 = vadd.f32 %v352, %v471
        %v514 = vadd.f32 %v353, %v476
        %v515 = vadd.f32 %v354, %v481
        %v516 = vadd.f32 %v355, %v486
        %v517 = vadd.f32 %v356, %v491
        %v518 = vadd.f32 %v357, %v496
        %v519 = vadd.f32 %v358, %v501
        %vm520 = vcmask 261120
        %521 = vst.msk [vmem:[#allocation2] sm:$0xff] %vm520, %v504
        %522 = vst.msk [vmem:[#allocation2 + $0x8] sm:$0xff] %vm520, %v505
        %523 = vst.msk [vmem:[#allocation2 + $0x10] sm:$0xff] %vm520, %v506
        %524 = vst.msk [vmem:[#allocation2 + $0x18] sm:$0xff] %vm520, %v507
        %525 = vst.msk [vmem:[#allocation2 + $0x20] sm:$0xff] %vm520, %v508
        %526 = vst.msk [vmem:[#allocation2 + $0x28] sm:$0xff] %vm520, %v509
        %527 = vst.msk [vmem:[#allocation2 + $0x30] sm:$0xff] %vm520, %v510
        %528 = vst.msk [vmem:[#allocation2 + $0x38] sm:$0xff] %vm520, %v511
        %529 = vst.msk [vmem:[#allocation2 + $0x40] sm:$0xff] %vm520, %v512
        %530 = vst.msk [vmem:[#allocation2 + $0x48] sm:$0xff] %vm520, %v513
        %531 = vst.msk [vmem:[#allocation2 + $0x50] sm:$0xff] %vm520, %v514
        %532 = vst.msk [vmem:[#allocation2 + $0x58] sm:$0xff] %vm520, %v515
        %533 = vst.msk [vmem:[#allocation2 + $0x60] sm:$0xff] %vm520, %v516
        %534 = vst.msk [vmem:[#allocation2 + $0x68] sm:$0xff] %vm520, %v517
        %535 = vst.msk [vmem:[#allocation2 + $0x70] sm:$0xff] %vm520, %v518
        %536 = vst.msk [vmem:[#allocation2 + $0x78] sm:$0xff] %vm520, %v519
        // Predicated region
        $region45: #{tpu_custom_call.1} parent=35 // pred_check
          %p537 = pneg %p258
        $region46: #{tpu_custom_call.1} parent=35 // pred_check_branch
          %539 = sbr.rel (%p537) target = $region48
        $region47: #{tpu_custom_call.1} parent=35 // pred_region
          %v540 = vld [vmem:[#allocation2] sm:$0xff]
          %v541 = vld [vmem:[#allocation2 + $0x8] sm:$0xff]
          %v542 = vld [vmem:[#allocation2 + $0x10] sm:$0xff]
          %v543 = vld [vmem:[#allocation2 + $0x18] sm:$0xff]
          %v544 = vld [vmem:[#allocation2 + $0x20] sm:$0xff]
          %v545 = vld [vmem:[#allocation2 + $0x28] sm:$0xff]
          %v546 = vld [vmem:[#allocation2 + $0x30] sm:$0xff]
          %v547 = vld [vmem:[#allocation2 + $0x38] sm:$0xff]
          %v548 = vld [vmem:[#allocation2 + $0x40] sm:$0xff]
          %v549 = vld [vmem:[#allocation2 + $0x48] sm:$0xff]
          %v550 = vld [vmem:[#allocation2 + $0x50] sm:$0xff]
          %v551 = vld [vmem:[#allocation2 + $0x58] sm:$0xff]
          %v552 = vld [vmem:[#allocation2 + $0x60] sm:$0xff]
          %v553 = vld [vmem:[#allocation2 + $0x68] sm:$0xff]
          %v554 = vld [vmem:[#allocation2 + $0x70] sm:$0xff]
          %v555 = vld [vmem:[#allocation2 + $0x78] sm:$0xff]
          %v556 = vld [vmem:[%s2] sm:$0xff]
          %v557 = vld [vmem:[%s2 + $0x8] sm:$0xff]
          %v558 = vld [vmem:[%s2 + $0x10] sm:$0xff]
          %v559 = vld [vmem:[%s2 + $0x18] sm:$0xff]
          %v560 = vld [vmem:[%s3] sm:$0x1]
          %v562 = vlaneseq
          %v563 = vshrl.u32 %v562, 7
          %v564 = vsub.s32 0, %v563
          %v565 = vrot.slane %v560, %v564
          %v568 = vsel %vm520, %v540, 0
          %v571 = vsel %vm520, %v541, 0
          %v574 = vsel %vm520, %v542, 0
          %v577 = vsel %vm520, %v543, 0
          %v580 = vsel %vm520, %v544, 0
          %v583 = vsel %vm520, %v545, 0
          %v586 = vsel %vm520, %v546, 0
          %v589 = vsel %vm520, %v547, 0
          %v592 = vsel %vm520, %v548, 0
          %v595 = vsel %vm520, %v549, 0
          %v598 = vsel %vm520, %v550, 0
          %v601 = vsel %vm520, %v551, 0
          %v604 = vsel %vm520, %v552, 0
          %v607 = vsel %vm520, %v553, 0
          %v610 = vsel %vm520, %v554, 0
          %v613 = vsel %vm520, %v555, 0
          %615 = vmatprep.subr.mxu0 0.0
          %616 = vmatpush1.msra.mxu0 0.0
          %617 = vmatprep.subr.mxu0 0.0
          %618 = vmatpush1.msra.mxu0 0.0
          %619 = vmatprep.subr.mxu0 0.0
          %620 = vmatpush1.msra.mxu0 0.0
          %621 = vmatprep.subr.mxu0 0.0
          %622 = vmatpush1.msra.mxu0 0.0
          %623 = vmatprep.subr.mxu0 0.0
          %624 = vmatpush1.msra.mxu0 0.0
          %625 = vmatprep.subr.mxu0 0.0
          %626 = vmatpush1.msra.mxu0 0.0
          %627 = vmatprep.subr.mxu0 0.0
          %628 = vmatpush1.msra.mxu0 0.0
          %629 = vmatprep.subr.mxu0 0.0
          %630 = vmatpush1.msra.mxu0 0.0
          %631 = vmatprep.subr.mxu0 0.0
          %632 = vmatpush1.msra.mxu0 0.0
          %633 = vmatprep.subr.mxu0 0.0
          %634 = vmatpush1.msra.mxu0 0.0
          %635 = vmatprep.subr.mxu0 0.0
          %636 = vmatpush1.msra.mxu0 0.0
          %637 = vmatprep.subr.mxu0 0.0
          %638 = vmatpush1.msra.mxu0 0.0
          %639 = vmatprep.subr.mxu0 0.0
          %640 = vmatpush1.msra.mxu0 %v559
          %641 = vmatprep.subr.mxu0 0.0
          %642 = vmatpush1.msra.mxu0 %v558
          %643 = vmatprep.subr.mxu0 0.0
          %644 = vmatpush1.msra.mxu0 %v557
          %645 = vmatprep.subr.mxu0 0.0
          %646 = vmatpush1.msra.mxu0 %v556
          %647 = vmatprep.subr.mxu0 0.0
          %648 = vmatpush2.msra.mxu0 0.0
          %649 = vmatprep.subr.mxu0 0.0
          %650 = vmatpush2.msra.mxu0 0.0
          %651 = vmatprep.subr.mxu0 0.0
          %652 = vmatpush2.msra.mxu0 0.0
          %653 = vmatprep.subr.mxu0 0.0
          %654 = vmatpush2.msra.mxu0 0.0
          %655 = vmatprep.subr.mxu0 0.0
          %656 = vmatpush2.msra.mxu0 0.0
          %657 = vmatprep.subr.mxu0 0.0
          %658 = vmatpush2.msra.mxu0 0.0
          %659 = vmatprep.subr.mxu0 0.0
          %660 = vmatpush2.msra.mxu0 0.0
          %661 = vmatprep.subr.mxu0 0.0
          %662 = vmatpush2.msra.mxu0 0.0
          %663 = vmatprep.subr.mxu0 0.0
          %664 = vmatpush2.msra.mxu0 0.0
          %665 = vmatprep.subr.mxu0 0.0
          %666 = vmatpush2.msra.mxu0 0.0
          %667 = vmatprep.subr.mxu0 0.0
          %668 = vmatpush2.msra.mxu0 0.0
          %669 = vmatprep.subr.mxu0 0.0
          %670 = vmatpush2.msra.mxu0 0.0
          %671 = vmatprep.subr.mxu0 0.0
          %672 = vmatpush2.msra.mxu0 0.0
          %673 = vmatprep.subr.mxu0 0.0
          %674 = vmatpush2.msra.mxu0 0.0
          %675 = vmatprep.subr.mxu0 0.0
          %676 = vmatpush2.msra.mxu0 0.0
          %677 = vmatprep.subr.mxu0 0.0
          %678 = vmatpush2.msra.mxu0 0.0
          %679 = vmatprep.mubr.f32.mxu0 0.0
          %680 = vmatmul.mubr.f32.gmra.mxu0 %v568
          %v681 = vpop.f32.mrf.mxu0
          %v682 = vadd.f32 %v565, %v681
          %v683 = vpop.f32.mrf.mxu0
          %684 = vmatprep.mubr.f32.mxu0 0.0
          %685 = vmatmul.mubr.f32.gmra.mxu0 %v571
          %v686 = vpop.f32.mrf.mxu0
          %v687 = vadd.f32 %v565, %v686
          %v688 = vpop.f32.mrf.mxu0
          %689 = vmatprep.mubr.f32.mxu0 0.0
          %690 = vmatmul.mubr.f32.gmra.mxu0 %v574
          %v691 = vpop.f32.mrf.mxu0
          %v692 = vadd.f32 %v565, %v691
          %v693 = vpop.f32.mrf.mxu0
          %694 = vmatprep.mubr.f32.mxu0 0.0
          %695 = vmatmul.mubr.f32.gmra.mxu0 %v577
          %v696 = vpop.f32.mrf.mxu0
          %v697 = vadd.f32 %v565, %v696
          %v698 = vpop.f32.mrf.mxu0
          %699 = vmatprep.mubr.f32.mxu0 0.0
          %700 = vmatmul.mubr.f32.gmra.mxu0 %v580
          %v701 = vpop.f32.mrf.mxu0
          %v702 = vadd.f32 %v565, %v701
          %v703 = vpop.f32.mrf.mxu0
          %704 = vmatprep.mubr.f32.mxu0 0.0
          %705 = vmatmul.mubr.f32.gmra.mxu0 %v583
          %v706 = vpop.f32.mrf.mxu0
          %v707 = vadd.f32 %v565, %v706
          %v708 = vpop.f32.mrf.mxu0
          %709 = vmatprep.mubr.f32.mxu0 0.0
          %710 = vmatmul.mubr.f32.gmra.mxu0 %v586
          %v711 = vpop.f32.mrf.mxu0
          %v712 = vadd.f32 %v565, %v711
          %v713 = vpop.f32.mrf.mxu0
          %714 = vmatprep.mubr.f32.mxu0 0.0
          %715 = vmatmul.mubr.f32.gmra.mxu0 %v589
          %v716 = vpop.f32.mrf.mxu0
          %v717 = vadd.f32 %v565, %v716
          %v718 = vpop.f32.mrf.mxu0
          %719 = vmatprep.mubr.f32.mxu0 0.0
          %720 = vmatmul.mubr.f32.gmra.mxu0 %v592
          %v721 = vpop.f32.mrf.mxu0
          %v722 = vadd.f32 %v565, %v721
          %v723 = vpop.f32.mrf.mxu0
          %724 = vmatprep.mubr.f32.mxu0 0.0
          %725 = vmatmul.mubr.f32.gmra.mxu0 %v595
          %v726 = vpop.f32.mrf.mxu0
          %v727 = vadd.f32 %v565, %v726
          %v728 = vpop.f32.mrf.mxu0
          %729 = vmatprep.mubr.f32.mxu0 0.0
          %730 = vmatmul.mubr.f32.gmra.mxu0 %v598
          %v731 = vpop.f32.mrf.mxu0
          %v732 = vadd.f32 %v565, %v731
          %v733 = vpop.f32.mrf.mxu0
          %734 = vmatprep.mubr.f32.mxu0 0.0
          %735 = vmatmul.mubr.f32.gmra.mxu0 %v601
          %v736 = vpop.f32.mrf.mxu0
          %v737 = vadd.f32 %v565, %v736
          %v738 = vpop.f32.mrf.mxu0
          %739 = vmatprep.mubr.f32.mxu0 0.0
          %740 = vmatmul.mubr.f32.gmra.mxu0 %v604
          %v741 = vpop.f32.mrf.mxu0
          %v742 = vadd.f32 %v565, %v741
          %v743 = vpop.f32.mrf.mxu0
          %744 = vmatprep.mubr.f32.mxu0 0.0
          %745 = vmatmul.mubr.f32.gmra.mxu0 %v607
          %v746 = vpop.f32.mrf.mxu0
          %v747 = vadd.f32 %v565, %v746
          %v748 = vpop.f32.mrf.mxu0
          %749 = vmatprep.mubr.f32.mxu0 0.0
          %750 = vmatmul.mubr.f32.gmra.mxu0 %v610
          %v751 = vpop.f32.mrf.mxu0
          %v752 = vadd.f32 %v565, %v751
          %v753 = vpop.f32.mrf.mxu0
          %754 = vmatprep.mubr.f32.mxu0 0.0
          %755 = vmatmul.mubr.f32.gmra.mxu0 %v613
          %v756 = vpop.f32.mrf.mxu0
          %v757 = vadd.f32 %v565, %v756
          %v758 = vpop.f32.mrf.mxu0
          %759 = vdwg.mxu0
          %760 = vst [vmem:[%s248] sm:$0xff] %v682
          %761 = vst [vmem:[%s248 + $0x8] sm:$0xff] %v687
          %762 = vst [vmem:[%s248 + $0x10] sm:$0xff] %v692
          %763 = vst [vmem:[%s248 + $0x18] sm:$0xff] %v697
          %764 = vst [vmem:[%s248 + $0x20] sm:$0xff] %v702
          %765 = vst [vmem:[%s248 + $0x28] sm:$0xff] %v707
          %766 = vst [vmem:[%s248 + $0x30] sm:$0xff] %v712
          %767 = vst [vmem:[%s248 + $0x38] sm:$0xff] %v717
          %768 = vst [vmem:[%s248 + $0x40] sm:$0xff] %v722
          %769 = vst [vmem:[%s248 + $0x48] sm:$0xff] %v727
          %770 = vst [vmem:[%s248 + $0x50] sm:$0xff] %v732
          %771 = vst [vmem:[%s248 + $0x58] sm:$0xff] %v737
          %772 = vst [vmem:[%s248 + $0x60] sm:$0xff] %v742
          %773 = vst [vmem:[%s248 + $0x68] sm:$0xff] %v747
          %774 = vst [vmem:[%s248 + $0x70] sm:$0xff] %v752
          %775 = vst [vmem:[%s248 + $0x78] sm:$0xff] %v757
        $region48: #{tpu_custom_call.1} parent=35 // pred_fallthru
          _
        %s776 = sand.u32 %s137, 1
        %s777 = scalar_lea.sflag [#allocation5], %s776
        %s778 = sand.u32 %s137, 1
        %s779 = smul.addr %s778, 128
        %s780 = scalar_lea.vmem [#allocation6], %s779
        // Predicated region
        $region49: #{tpu_custom_call.1} parent=35 // pred_check
          %p781 = pneg %p147
        $region50: #{tpu_custom_call.1} parent=35 // pred_check_branch
          %783 = sbr.rel (%p781) target = $region52
        $region51: #{tpu_custom_call.1} parent=35 // pred_region
          %s784 = smul.u32 16, %s25
          %s786 = ssub.s32 2048, 2048
          %787 = vsyncadd %s777, %s786
          %s788 = smul.addr %s784, 128
          %s789 = scalar_lea.hbm %s4, %s788
          %s790 = sshll.u32 %s780, 4
          %s791 = int_to_ptr.vmem [resolvable:$true] %s790
          %796 = dma.vmem_to_hbm [thread:$0]  %s791, 2048, %s789, %s777, 128, 128, 8
        $region52: #{tpu_custom_call.1} parent=35 // pred_fallthru
          _
      $region36: #{tpu_custom_call.1} parent=5 // pred_fallthru
        _
      %p797 = scmp.le.s32.totalorder 2, %s16
      // Predicated region
      $region53: #{tpu_custom_call.1} parent=5 // pred_check
        %p798 = pneg %p797
      $region54: #{tpu_custom_call.1} parent=5 // pred_check_branch
        %800 = sbr.rel (%p798) target = $region56
      $region55: #{tpu_custom_call.1} parent=5 // pred_region
        %s801 = ssub.s32 %s16, 2
        // Predicated region
        $region57: #{tpu_custom_call.1} parent=55 // pred_check
          %p802 = pneg %p153
        $region58: #{tpu_custom_call.1} parent=55 // pred_check_branch
          %804 = sbr.rel (%p802) target = $region60
        $region59: #{tpu_custom_call.1} parent=55 // pred_region
          %s805 = sand.u32 %s138, 1
          %s806 = scalar_lea.sflag [#allocation5], %s805
          %s807 = sand.u32 %s138, 1
          %s808 = smul.addr %s807, 128
          %s809 = scalar_lea.vmem [#allocation6], %s808
          %810 = dma.done %s806, 2048
        $region60: #{tpu_custom_call.1} parent=55 // pred_fallthru
          _
      $region56: #{tpu_custom_call.1} parent=5 // pred_fallthru
        _
    $region6: #{tpu_custom_call.1} parent=1 // loop_footer
      %s20 = sadd.s32 1, %s16
    $region7: #{tpu_custom_call.1} parent=1 // loop_footer_branch
      %15 = sbr.rel target = $region3
    $region8: #{tpu_custom_call.1} parent=1 // loop_exit
      _
    %811 = vsyncpa [#allocation4], 1
    %s812 = scalar_lea.sflag [#allocation4], 1
    %813 = vsyncpa %s812, 1
    %814 = vsyncpa [#allocation5], 1
    %s815 = scalar_lea.sflag [#allocation5], 1
    %816 = vsyncpa %s815, 1

</llo_original>
